<compile_context>
chip_gen: v6e
topology: v6e:2x2x1
jax: 0.10.0
libtpu: 0.0.40
codegen_flags: <defaults>
</compile_context>

<pallas_src>
import jax
import jax.numpy as jnp
from jax import lax
from jax.experimental import pallas as pl
from jax.experimental.pallas import tpu as pltpu

EMBEDDING_DIM = 128   # embedding_dim in the PyTorch module
BLOCK_SIZE = 128      # max sequence length (causal mask buffer size)
HEAD_SIZE = 64        # head_size passed to the module constructor
_NEG_BIG = -1e30      # finite "minus infinity" (NaN-safe for fully masked rows)


# --------------------------------------------------------------------------- #
# Hardware-aware sizing helpers
# --------------------------------------------------------------------------- #
def _tpu_generation():
    try:
        kind = jax.devices()[0].device_kind.lower()
    except Exception:
        return None
    for g in (7, 6, 5, 4):
        if f"v{g}" in kind or f"{g}x" in kind:
            return g
    return None


def _per_elem_vmem_bytes(T, C, H):
    """Rough live-VMEM bytes per batch element inside the kernel."""
    b = 0
    b += 2 * T * C * 4        # x f32 tile, double-buffered
    b += T * C * 2            # x bf16 copy
    b += T * 3 * H * 4        # qkv f32 accumulator
    b += T * 3 * H * 2        # qkv bf16
    b += 2 * T * T * 4        # scores + exp(p) f32
    b += T * T * 2            # probs bf16
    b += T * H * 4            # out f32
    b += 2 * T * H * 4        # output tile, double-buffered
    return b


def _pick_block_b(B, T, C, H, gen):
    per = _per_elem_vmem_bytes(T, C, H)
    if gen == 7:
        budget = 40 << 20     # 64 MiB physical per TC -> leave headroom
    elif gen in (5, 6):
        budget = 88 << 20     # 128 MiB physical
    else:
        budget = 24 << 20     # unknown chip: stay conservative
    cap = max(1, budget // per)
    divisors = [d for d in range(1, B + 1) if B % d == 0]

    def best(cands):
        if not cands:
            return None
        evens = [d for d in cands if d % 2 == 0]
        # Even block_b enables the lane-dense packed output (biggest single
        # lever); take the largest even unless it forfeits most of the tile.
        if evens and 2 * max(evens) >= max(cands):
            return max(evens)
        return max(cands)

    if gen == 7:
        # Keep both TensorCores busy: even grid length >= 2 when possible.
        bb = best([d for d in divisors if d <= cap and (B // d) % 2 == 0])
        if bb is None:
            bb = best([d for d in divisors if d <= cap and (B // d) >= 2])
    else:
        # Single TensorCore (v5e/v6e): biggest tile, ideally grid=(1,).
        bb = None
    if bb is None:
        bb = best([d for d in divisors if d <= cap]) or 1
    return bb


def _vmem_limit_bytes(block_b, T, C, H, gen):
    need = block_b * _per_elem_vmem_bytes(T, C, H) + 4 * C * 3 * H + (4 << 20)
    if gen == 7:
        cap = 56 << 20
    elif gen in (4, 5, 6):
        cap = 110 << 20
    else:
        cap = 32 << 20
    return int(min(cap, max(32 << 20, need)))


# --------------------------------------------------------------------------- #
# Kernel
# --------------------------------------------------------------------------- #
def _split_pairs(a, nb):
    """(2*nb, ...) -> two (nb, ...) arrays (even/odd batch elements)."""
    a = a.reshape(nb, 2, *a.shape[1:])
    return a[:, 0], a[:, 1]


def _make_attn_kernel(block_b: int, T: int, H: int,
                      pack_pairs: bool, blockdiag_pv: bool):
    def kernel(x_ref, wqkv_ref, o_ref):
        # x_ref: (block_b, T, C) f32; wqkv_ref: (C, 3H) bf16 (scale pre-folded).
        C = x_ref.shape[-1]

        # Fused QKV projection: one tall (block_b*T, C) @ (C, 3H) MXU pass,
        # bf16 operands, f32 accumulation, single cast of the result.
        x2d = x_ref[...].reshape(block_b * T, C).astype(jnp.bfloat16)
        qkv = jnp.dot(x2d, wqkv_ref[...], preferred_element_type=jnp.float32)
        qkv = qkv.reshape(block_b, T, 3 * H).astype(jnp.bfloat16)

        q = qkv[:, :, 0 * H:1 * H]
        k = qkv[:, :, 1 * H:2 * H]
        v = qkv[:, :, 2 * H:3 * H]

        # QK^T contracting the last dims directly (no explicit transpose).
        scores = jnp.einsum("bth,bsh->bts", q, k,
                            preferred_element_type=jnp.float32)

        # Causal mask via select (no f32 bias add).
        row = lax.broadcasted_iota(jnp.int32, (T, T), 0)
        col = lax.broadcasted_iota(jnp.int32, (T, T), 1)
        scores = jnp.where((col <= row)[None, :, :], scores, _NEG_BIG)

        # Numerically stable softmax in f32; divide via EUP reciprocal.
        m = jnp.max(scores, axis=-1, keepdims=True)
        p = jnp.exp(scores - m)
        denom = jnp.sum(p, axis=-1, keepdims=True)
        probs = (p * pl.reciprocal(denom, approx=True)).astype(jnp.bfloat16)

        if pack_pairs and blockdiag_pv:
            # v6e/v7x: block-diagonal pair packing.  (T, 2T) @ (2T, 2H) fills
            # the 256-deep MXU and produces the lane-packed output directly.
            nb = block_b // 2
            p0, p1 = _split_pairs(probs, nb)                       # (nb, T, T)
            v0, v1 = _split_pairs(v, nb)                           # (nb, T, H)
            p_pair = jnp.concatenate([p0, p1], axis=-1)            # (nb, T, 2T)
            zeros = jnp.zeros_like(v0)
            v_bd = jnp.concatenate(
                [jnp.concatenate([v0, zeros], axis=-1),
                 jnp.concatenate([zeros, v1], axis=-1)], axis=1)   # (nb, 2T, 2H)
            out_packed = jnp.einsum("bts,bsh->bth", p_pair, v_bd,
                                    preferred_element_type=jnp.float32)
            o_ref[...] = out_packed.astype(o_ref.dtype)
        else:
            out = jnp.einsum("bts,bsh->bth", probs, v,
                             preferred_element_type=jnp.float32)   # (bb, T, H)
            if pack_pairs:
                # Single vectorized lane-pack + full-lane store.
                nb = block_b // 2
                o0, o1 = _split_pairs(out, nb)
                o_ref[...] = jnp.concatenate([o0, o1], axis=-1).astype(o_ref.dtype)
            else:
                o_ref[...] = out.astype(o_ref.dtype)

    return kernel


# --------------------------------------------------------------------------- #
# Wrapper
# --------------------------------------------------------------------------- #
def single_head_attention(x, wq, wk, wv, *, block_b=None):
    """x: (B, T, C) f32; wq/wk/wv: (C, H) f32 (== W_pt.T of the nn.Linear weights)."""
    B, T, C = x.shape
    H = wq.shape[1]
    assert T <= BLOCK_SIZE, "TODO(synk): flash-style KV tiling for T > 128"

    gen = _tpu_generation()
    if block_b is None:
        block_b = _pick_block_b(B, T, C, H, gen)
    assert B % block_b == 0

    # Pack batch pairs along the lane axis only when H alone is not lane-dense.
    pack_pairs = (block_b % 2 == 0) and (H % 128 != 0) and ((2 * H) % 128 == 0)
    # Block-diagonal PV packing only on 256-deep MXUs (v6e/v7x) and 2T <= 256.
    blockdiag_pv = pack_pairs and (gen in (6, 7)) and (2 * T <= 256)

    # Fold the 1/sqrt(head_size) attention scale into Wq; fuse the three
    # projection weights into one lane-dense (C, 3H) bf16 MXU operand.
    scale = jnp.float32(1.0 / (H ** 0.5))
    wqkv = jnp.concatenate([wq * scale, wk, wv], axis=1).astype(jnp.bfloat16)

    kernel = _make_attn_kernel(block_b, T, H, pack_pairs, blockdiag_pv)

    if pack_pairs:
        out_shape = jax.ShapeDtypeStruct((B // 2, T, 2 * H), jnp.float32)
        out_spec = pl.BlockSpec((block_b // 2, T, 2 * H), lambda i: (i, 0, 0))
    else:
        out_shape = jax.ShapeDtypeStruct((B, T, H), jnp.float32)
        out_spec = pl.BlockSpec((block_b, T, H), lambda i: (i, 0, 0))

    grid_spec = pltpu.PrefetchScalarGridSpec(
        num_scalar_prefetch=0,
        grid=(B // block_b,),
        in_specs=[
            pl.BlockSpec((block_b, T, C), lambda i: (i, 0, 0)),
            pl.BlockSpec((C, 3 * H), lambda i: (0, 0)),
        ],
        out_specs=out_spec,
    )

    out = pl.pallas_call(
        kernel,
        out_shape=out_shape,
        grid_spec=grid_spec,
        compiler_params=pltpu.CompilerParams(
            dimension_semantics=("parallel",),
            vmem_limit_bytes=_vmem_limit_bytes(block_b, T, C, H, gen)),
    )(x, wqkv)

    if pack_pairs:
        # (B//2, T, 2H) -> (B, T, H): undo the batch-pair lane packing
        # (one-time layout plumbing in the wrapper).
        out = out.reshape(B // 2, T, 2, H).swapaxes(1, 2).reshape(B, T, H)
    return out


def _reference(x, wq, wk, wv):
    """Pure-JAX f32 reference mirroring the PyTorch forward (eval mode)."""
    q = x @ wq
    k = x @ wk
    v = x @ wv
    H = wq.shape[1]
    logits = jnp.einsum("btd,bsd->bts", q, k) / (H ** 0.5)
    T = x.shape[1]
    tril = jnp.tril(jnp.ones((T, T), dtype=bool))
    logits = jnp.where(tril, logits, -jnp.inf)
    probs = jax.nn.softmax(logits, axis=-1)
    return jnp.einsum("bts,bsd->btd", probs, v)


if __name__ == "__main__":
    key = jax.random.PRNGKey(0)
    k_x, k_q, k_k, k_v = jax.random.split(key, 4)

    B, T, C, H = 4, 8, EMBEDDING_DIM, HEAD_SIZE

    x = jax.random.normal(k_x, (B, T, C), dtype=jnp.float32)

    # nn.Linear default init: U(-1/sqrt(fan_in), 1/sqrt(fan_in)); kernel layout
    # is (C, H) == W_pt.T.
    bound = 1.0 / (C ** 0.5)
    wq = jax.random.uniform(k_q, (C, H), jnp.float32, -bound, bound)
    wk = jax.random.uniform(k_k, (C, H), jnp.float32, -bound, bound)
    wv = jax.random.uniform(k_v, (C, H), jnp.float32, -bound, bound)

    out = single_head_attention(x, wq, wk, wv)
    jax.block_until_ready(out)

    ref = _reference(x, wq, wk, wv)
    assert out.shape == (B, T, H)
    # bf16 MXU operands + approx reciprocal -> relaxed tolerance vs f32 reference.
    assert jnp.allclose(out, ref, atol=2.5e-2, rtol=2.5e-2), "mismatch vs reference"

    print("KERNEL_OK")
</pallas_src>

<mosaic_0001>
module attributes {stable_mosaic.version = 11 : i64} {
  func.func @kernel(%arg0: i32, %arg1: memref<4x8x128xf32, #tpu.memory_space<vmem>>, %arg2: memref<128x192xbf16, #tpu.memory_space<vmem>>, %arg3: memref<2x8x128xf32, #tpu.memory_space<vmem>>) attributes {dimension_semantics = [#tpu.dimension_semantics<parallel>], iteration_bounds = array<i64: 1>, scalar_prefetch = 0 : i64, scratch_operands = 0 : i64, tpu.core_type = #tpu.core_type<tc>, window_params = [{transform_indices = @transform_0, window_bounds = array<i64: 4, 8, 128>}, {pipeline_mode = #tpu.pipeline_mode<synchronous>, transform_indices = @transform_1, window_bounds = array<i64: 128, 192>}, {transform_indices = @transform_2, window_bounds = array<i64: 2, 8, 128>}]} {
    %c0 = arith.constant 0 : index
    %c0_0 = arith.constant 0 : index
    %c0_1 = arith.constant 0 : index
    %0 = vector.load %arg1[%c0, %c0_0, %c0_1] : memref<4x8x128xf32, #tpu.memory_space<vmem>>, vector<4x8x128xf32>
    %1 = vector.shape_cast %0 : vector<4x8x128xf32> to vector<32x128xf32>
    %2 = arith.truncf %1 : vector<32x128xf32> to vector<32x128xbf16>
    %c0_2 = arith.constant 0 : index
    %c0_3 = arith.constant 0 : index
    %3 = vector.load %arg2[%c0_2, %c0_3] : memref<128x192xbf16, #tpu.memory_space<vmem>>, vector<128x192xbf16>
    %cst = arith.constant dense<0.000000e+00> : vector<32x192xf32>
    %4 = tpu.matmul %2, %3, %cst {dimension_numbers = #tpu.dot_dimension_numbers<[1], [0], [0], [1], [0, 0, 1, 1], [], []>} : vector<32x128xbf16>, vector<128x192xbf16>, vector<32x192xf32> -> vector<32x192xf32>
    %5 = vector.shape_cast %4 : vector<32x192xf32> to vector<4x8x192xf32>
    %6 = arith.truncf %5 : vector<4x8x192xf32> to vector<4x8x192xbf16>
    %7 = vector.extract_strided_slice %6 {offsets = [0, 0, 0], sizes = [4, 8, 64], strides = [1, 1, 1]} : vector<4x8x192xbf16> to vector<4x8x64xbf16>
    %8 = vector.extract_strided_slice %6 {offsets = [0, 0, 64], sizes = [4, 8, 64], strides = [1, 1, 1]} : vector<4x8x192xbf16> to vector<4x8x64xbf16>
    %9 = vector.extract_strided_slice %6 {offsets = [0, 0, 128], sizes = [4, 8, 64], strides = [1, 1, 1]} : vector<4x8x192xbf16> to vector<4x8x64xbf16>
    "tpu.trace_start"() <{level = 10 : i32, message = "bth,bsh->bts"}> : () -> ()
    %cst_4 = arith.constant dense<0.000000e+00> : vector<4x8x8xf32>
    %10 = tpu.matmul %7, %8, %cst_4 {dimension_numbers = #tpu.dot_dimension_numbers<[2], [2], [1], [1], [0, 0, 0, 1, 1, 1], [0], [0]>} : vector<4x8x64xbf16>, vector<4x8x64xbf16>, vector<4x8x8xf32> -> vector<4x8x8xf32>
    "tpu.trace_stop"() : () -> ()
    %11 = tpu.iota {dimensions = array<i32: 0>} : vector<8x8xi32>
    %12 = tpu.iota {dimensions = array<i32: 1>} : vector<8x8xi32>
    %13 = arith.cmpi sle, %12, %11 : vector<8x8xi32>
    %14 = vector.shape_cast %13 : vector<8x8xi1> to vector<1x8x8xi1>
    %cst_5 = arith.constant -1.000000e+30 : f32
    %15 = vector.shape_cast %14 : vector<1x8x8xi1> to vector<1x8x8xi1>
    %16 = vector.broadcast %15 : vector<1x8x8xi1> to vector<4x8x8xi1>
    %17 = vector.broadcast %cst_5 : f32 to vector<4x8x8xf32>
    %18 = arith.select %16, %10, %17 : vector<4x8x8xi1>, vector<4x8x8xf32>
    %cst_6 = arith.constant dense<0xFF800000> : vector<4x8xf32>
    %19 = vector.multi_reduction <maximumf>, %18, %cst_6 [2] : vector<4x8x8xf32> to vector<4x8xf32>
    %20 = vector.shape_cast %19 : vector<4x8xf32> to vector<4x8x1xf32>
    %21 = vector.broadcast %20 : vector<4x8x1xf32> to vector<4x8x8xf32>
    %22 = arith.subf %18, %21 : vector<4x8x8xf32>
    %23 = math.exp %22 : vector<4x8x8xf32>
    %cst_7 = arith.constant dense<0.000000e+00> : vector<4x8xf32>
    %24 = vector.multi_reduction <add>, %23, %cst_7 [2] : vector<4x8x8xf32> to vector<4x8xf32>
    %25 = vector.shape_cast %24 : vector<4x8xf32> to vector<4x8x1xf32>
    %26 = tpu.reciprocal %25 {approx = true} : vector<4x8x1xf32> -> vector<4x8x1xf32>
    %27 = vector.broadcast %26 : vector<4x8x1xf32> to vector<4x8x8xf32>
    %28 = arith.mulf %23, %27 : vector<4x8x8xf32>
    %29 = arith.truncf %28 : vector<4x8x8xf32> to vector<4x8x8xbf16>
    "tpu.trace_start"() <{level = 10 : i32, message = "bts,bsh->bth"}> : () -> ()
    %cst_8 = arith.constant dense<0.000000e+00> : vector<4x8x64xf32>
    %30 = tpu.matmul %29, %9, %cst_8 {dimension_numbers = #tpu.dot_dimension_numbers<[2], [1], [1], [2], [0, 0, 0, 1, 1, 2], [0], [0]>} : vector<4x8x8xbf16>, vector<4x8x64xbf16>, vector<4x8x64xf32> -> vector<4x8x64xf32>
    "tpu.trace_stop"() : () -> ()
    %31 = vector.shape_cast %30 : vector<4x8x64xf32> to vector<2x2x8x64xf32>
    %32 = vector.extract_strided_slice %31 {offsets = [0, 0, 0, 0], sizes = [2, 1, 8, 64], strides = [1, 1, 1, 1]} : vector<2x2x8x64xf32> to vector<2x1x8x64xf32>
    %33 = vector.shape_cast %32 : vector<2x1x8x64xf32> to vector<2x8x64xf32>
    %34 = vector.extract_strided_slice %31 {offsets = [0, 1, 0, 0], sizes = [2, 1, 8, 64], strides = [1, 1, 1, 1]} : vector<2x2x8x64xf32> to vector<2x1x8x64xf32>
    %35 = vector.shape_cast %34 : vector<2x1x8x64xf32> to vector<2x8x64xf32>
    %36 = tpu.concatenate %33, %35 in 2 : vector<2x8x64xf32>, vector<2x8x64xf32> -> vector<2x8x128xf32>
    %c0_9 = arith.constant 0 : index
    %c0_10 = arith.constant 0 : index
    %c0_11 = arith.constant 0 : index
    %37 = vector.load %arg3[%c0_9, %c0_10, %c0_11] : memref<2x8x128xf32, #tpu.memory_space<vmem>>, vector<2x8x128xf32>
    tpu.vector_store %arg3[%c0_9, %c0_10, %c0_11], %36 {strides = array<i32>} : memref<2x8x128xf32, #tpu.memory_space<vmem>>, vector<2x8x128xf32>,
    return
  }
  func.func @transform_0(%arg0: i32) -> (i32, i32, i32) {
    %c0_i32 = arith.constant 0 : i32
    %c0_i32_0 = arith.constant 0 : i32
    %c0_i32_1 = arith.constant 0 : i32
    return %arg0, %c0_i32, %c0_i32_0 : i32, i32, i32
  }
  func.func @transform_1(%arg0: i32) -> (i32, i32) {
    %c0_i32 = arith.constant 0 : i32
    %c0_i32_0 = arith.constant 0 : i32
    %c0_i32_1 = arith.constant 0 : i32
    return %c0_i32, %c0_i32_0 : i32, i32
  }
  func.func @transform_2(%arg0: i32) -> (i32, i32, i32) {
    %c0_i32 = arith.constant 0 : i32
    %c0_i32_0 = arith.constant 0 : i32
    %c0_i32_1 = arith.constant 0 : i32
    return %arg0, %c0_i32, %c0_i32_0 : i32, i32, i32
  }
}

</mosaic_0001>

<llo_original>
// kernel: tpu_custom_call.1
$region0: #{tpu_custom_call.1}
  #allocation0 [shape = 'u32[]', space=smem, size = 0x4, offset = 0x4, fixed_abs, tag = 'smem constant byte address 0x4 - core index']
  #allocation1 [shape = 'u32[144,128]{1,0:T(1,128)}', space=vmem, size = 0x12000, scoped, tag = 'internal scratch']
  %s0 = inlined_call_operand.vmem [shape: f32[4,8,128], index: 0, kind: input, shape index: {}]
  %s1 = inlined_call_operand.vmem [shape: bf16[128,192], index: 1, kind: input, shape index: {}]
  %s2 = inlined_call_operand.hbm [shape: f32[2,8,128], index: 2, kind: output, shape index: {}]
  %s3 = sld [smem:[#allocation0]]
  $region18: #{tpu_custom_call.1} parent=0
    _
  %s5 = ssub.s32 1, %s3
  %s6 = scalar_select 0, %s5, %s3
  $region1: #{tpu_custom_call.1} parent=0
    #allocation2 [shape = 'u8[8192]{0}', space=vmem, size = 0x2000, scoped, tag = 'output window, operand 0, single buffered']
    #allocation3 [shape = 's32[1]{0}', space=sflag, size = 0x4, scoped, tag = 'scoped memory for tpu_custom_call.1']
    %7 = vsyncpa [#allocation3], 0
    // Predicated region
    $region2: #{tpu_custom_call.1} parent=1 // pred_check
      _
    $region3: #{tpu_custom_call.1} parent=1 // pred_check_branch
      %9 = sbr.rel (0) target = $region5
    $region4: #{tpu_custom_call.1} parent=1 // pred_region
      _
    $region5: #{tpu_custom_call.1} parent=1 // pred_fallthru
      _
    // Predicated region
    $region6: #{tpu_custom_call.1} parent=1 // pred_check
      _
    $region7: #{tpu_custom_call.1} parent=1 // pred_check_branch
      %11 = sbr.rel (0) target = $region9
    $region8: #{tpu_custom_call.1} parent=1 // pred_region
      _
    $region9: #{tpu_custom_call.1} parent=1 // pred_fallthru
      _
    %v13 = vld [vmem:[%s0] sm:$0xff]
    %v14 = vld [vmem:[%s0 + $0x8] sm:$0xff]
    %v15 = vld [vmem:[%s0 + $0x10] sm:$0xff]
    %v16 = vld [vmem:[%s0 + $0x18] sm:$0xff]
    %v17 = vpack.c.bf16 %v14, %v13
    %v18 = vpack.c.bf16 %v16, %v15
    %v19 = vld [vmem:[%s1] sm:$0xff]
    %v20 = vld [vmem:[%s1 + $0x8] sm:$0xff]
    %v21 = vld [vmem:[%s1 + $0x10] sm:$0xff]
    %v22 = vld [vmem:[%s1 + $0x18] sm:$0xff]
    %v23 = vld [vmem:[%s1 + $0x20] sm:$0xff]
    %v24 = vld [vmem:[%s1 + $0x28] sm:$0xff]
    %v25 = vld [vmem:[%s1 + $0x30] sm:$0xff]
    %v26 = vld [vmem:[%s1 + $0x38] sm:$0xff]
    %v27 = vld [vmem:[%s1 + $0x40] sm:$0xff]
    %v28 = vld [vmem:[%s1 + $0x48] sm:$0xff]
    %v29 = vld [vmem:[%s1 + $0x50] sm:$0xff]
    %v30 = vld [vmem:[%s1 + $0x58] sm:$0xff]
    %v31 = vld [vmem:[%s1 + $0x60] sm:$0xff]
    %v32 = vld [vmem:[%s1 + $0x68] sm:$0xff]
    %v33 = vld [vmem:[%s1 + $0x70] sm:$0xff]
    %v34 = vld [vmem:[%s1 + $0x78] sm:$0xff]
    %v51 = vunpack.c.l.b16 %v19
    %v52 = vunpack.c.h.b16 %v19
    %v53 = vunpack.c.l.b16 %v20
    %v54 = vunpack.c.h.b16 %v20
    %v55 = vunpack.c.l.b16 %v21
    %v56 = vunpack.c.h.b16 %v21
    %v57 = vunpack.c.l.b16 %v22
    %v58 = vunpack.c.h.b16 %v22
    %v59 = vunpack.c.l.b16 %v23
    %v60 = vunpack.c.h.b16 %v23
    %v61 = vunpack.c.l.b16 %v24
    %v62 = vunpack.c.h.b16 %v24
    %v63 = vunpack.c.l.b16 %v25
    %v64 = vunpack.c.h.b16 %v25
    %v65 = vunpack.c.l.b16 %v26
    %v66 = vunpack.c.h.b16 %v26
    %v67 = vunpack.c.l.b16 %v27
    %v68 = vunpack.c.h.b16 %v27
    %v69 = vunpack.c.l.b16 %v28
    %v70 = vunpack.c.h.b16 %v28
    %v71 = vunpack.c.l.b16 %v29
    %v72 = vunpack.c.h.b16 %v29
    %v73 = vunpack.c.l.b16 %v30
    %v74 = vunpack.c.h.b16 %v30
    %v75 = vunpack.c.l.b16 %v31
    %v76 = vunpack.c.h.b16 %v31
    %v77 = vunpack.c.l.b16 %v32
    %v78 = vunpack.c.h.b16 %v32
    %v79 = vunpack.c.l.b16 %v33
    %v80 = vunpack.c.h.b16 %v33
    %v81 = vunpack.c.l.b16 %v34
    %v82 = vunpack.c.h.b16 %v34
    %v83 = vpack.c.b16 %v53, %v51
    %v84 = vpack.c.b16 %v54, %v52
    %v85 = vpack.c.b16 %v57, %v55
    %v86 = vpack.c.b16 %v58, %v56
    %v87 = vpack.c.b16 %v61, %v59
    %v88 = vpack.c.b16 %v62, %v60
    %v89 = vpack.c.b16 %v65, %v63
    %v90 = vpack.c.b16 %v66, %v64
    %v91 = vpack.c.b16 %v69, %v67
    %v92 = vpack.c.b16 %v70, %v68
    %v93 = vpack.c.b16 %v73, %v71
    %v94 = vpack.c.b16 %v74, %v72
    %v95 = vpack.c.b16 %v77, %v75
    %v96 = vpack.c.b16 %v78, %v76
    %v97 = vpack.c.b16 %v81, %v79
    %v98 = vpack.c.b16 %v82, %v80
    %115 = vmatprep.subr.bf16.mxu0 %v98
    %116 = vmatpush1.bf16.msra.mxu0 %v97
    %117 = vmatprep.subr.bf16.mxu0 %v96
    %118 = vmatpush1.bf16.msra.mxu0 %v95
    %119 = vmatprep.subr.bf16.mxu0 %v94
    %120 = vmatpush1.bf16.msra.mxu0 %v93
    %121 = vmatprep.subr.bf16.mxu0 %v92
    %122 = vmatpush1.bf16.msra.mxu0 %v91
    %123 = vmatprep.subr.bf16.mxu0 %v90
    %124 = vmatpush1.bf16.msra.mxu0 %v89
    %125 = vmatprep.subr.bf16.mxu0 %v88
    %126 = vmatpush1.bf16.msra.mxu0 %v87
    %127 = vmatprep.subr.bf16.mxu0 %v86
    %128 = vmatpush1.bf16.msra.mxu0 %v85
    %129 = vmatprep.subr.bf16.mxu0 %v84
    %130 = vmatpush1.bf16.msra.mxu0 %v83
    %131 = vmatprep.subr.bf16.mxu0 0
    %132 = vmatpush2.bf16.msra.mxu0 0
    %133 = vmatprep.subr.bf16.mxu0 0
    %134 = vmatpush2.bf16.msra.mxu0 0
    %135 = vmatprep.subr.bf16.mxu0 0
    %136 = vmatpush2.bf16.msra.mxu0 0
    %137 = vmatprep.subr.bf16.mxu0 0
    %138 = vmatpush2.bf16.msra.mxu0 0
    %139 = vmatprep.subr.bf16.mxu0 0
    %140 = vmatpush2.bf16.msra.mxu0 0
    %141 = vmatprep.subr.bf16.mxu0 0
    %142 = vmatpush2.bf16.msra.mxu0 0
    %143 = vmatprep.subr.bf16.mxu0 0
    %144 = vmatpush2.bf16.msra.mxu0 0
    %145 = vmatprep.subr.bf16.mxu0 0
    %146 = vmatpush2.bf16.msra.mxu0 0
    %147 = vmatprep.mubr.bf16.mxu0 0
    %148 = vmatmul.mubr.bf16.gmra.mxu0 %v17
    %v149 = vpop.f32.mrf.mxu0
    %v150 = vadd.f32 0.0, %v149
    %v151 = vpop.f32.mrf.mxu0
    %v152 = vadd.f32 0.0, %v151
    %v153 = vpop.f32.mrf.mxu0
    %v154 = vadd.f32 0.0, %v153
    %v155 = vpop.f32.mrf.mxu0
    %v156 = vadd.f32 0.0, %v155
    %157 = vmatprep.mubr.bf16.mxu0 0
    %158 = vmatmul.mubr.bf16.gmra.mxu0 %v18
    %v159 = vpop.f32.mrf.mxu0
    %v160 = vadd.f32 0.0, %v159
    %v161 = vpop.f32.mrf.mxu0
    %v162 = vadd.f32 0.0, %v161
    %v163 = vpop.f32.mrf.mxu0
    %v164 = vadd.f32 0.0, %v163
    %v165 = vpop.f32.mrf.mxu0
    %v166 = vadd.f32 0.0, %v165
    %167 = vdwg.mxu0
    %v168 = vpack.c.bf16 %v150, %v150
    %v169 = vpack.c.bf16 %v152, %v152
    %v170 = vpack.c.bf16 %v154, %v154
    %v171 = vpack.c.bf16 %v156, %v156
    %v172 = vpack.c.bf16 %v160, %v160
    %v173 = vpack.c.bf16 %v162, %v162
    %v174 = vpack.c.bf16 %v164, %v164
    %v175 = vpack.c.bf16 %v166, %v166
    %177 = vrot.lane.b32.xlu0 %v168, 64
    %v178 = vpop.permute.xlu0 %177
    %vm179 = vcmask 523264
    %v181 = vsel %vm179, %v168, 0
    %v184 = vsel %vm179, %v178, 0
    %186 = vmatprep.subr.bf16.mxu0 0
    %187 = vmatpush1.bf16.xpose.msra.mxu0 0
    %188 = vmatprep.subr.bf16.mxu0 0
    %189 = vmatpush1.bf16.xpose.msra.mxu0 0
    %190 = vmatprep.subr.bf16.mxu0 0
    %191 = vmatpush1.bf16.xpose.msra.mxu0 0
    %192 = vmatprep.subr.bf16.mxu0 0
    %193 = vmatpush1.bf16.xpose.msra.mxu0 0
    %194 = vmatprep.subr.bf16.mxu0 0
    %195 = vmatpush1.bf16.xpose.msra.mxu0 0
    %196 = vmatprep.subr.bf16.mxu0 0
    %197 = vmatpush1.bf16.xpose.msra.mxu0 0
    %198 = vmatprep.subr.bf16.mxu0 0
    %199 = vmatpush1.bf16.xpose.msra.mxu0 0
    %200 = vmatprep.subr.bf16.mxu0 0
    %201 = vmatpush1.bf16.xpose.msra.mxu0 %v184
    %202 = vmatprep.subr.bf16.mxu0 0
    %203 = vmatpush2.bf16.xpose.msra.mxu0 0
    %204 = vmatprep.subr.bf16.mxu0 0
    %205 = vmatpush2.bf16.xpose.msra.mxu0 0
    %206 = vmatprep.subr.bf16.mxu0 0
    %207 = vmatpush2.bf16.xpose.msra.mxu0 0
    %208 = vmatprep.subr.bf16.mxu0 0
    %209 = vmatpush2.bf16.xpose.msra.mxu0 0
    %210 = vmatprep.subr.bf16.mxu0 0
    %211 = vmatpush2.bf16.xpose.msra.mxu0 0
    %212 = vmatprep.subr.bf16.mxu0 0
    %213 = vmatpush2.bf16.xpose.msra.mxu0 0
    %214 = vmatprep.subr.bf16.mxu0 0
    %215 = vmatpush2.bf16.xpose.msra.mxu0 0
    %216 = vmatprep.subr.bf16.mxu0 0
    %217 = vmatpush2.bf16.xpose.msra.mxu0 0
    %218 = vmatprep.mubr.bf16.mxu0 0
    %219 = vmatmul.mubr.bf16.gmra.mxu0 %v181
    %v220 = vpop.f32.mrf.mxu0
    %v221 = vadd.f32 0.0, %v220
    %v222 = vpop.f32.mrf.mxu0
    %v223 = vpop.f32.mrf.mxu0
    %v224 = vpop.f32.mrf.mxu0
    %225 = vdwg.mxu0
    %227 = vrot.lane.b32.xlu0 %v170, 64
    %v228 = vpop.permute.xlu0 %227
    %v230 = vsel %vm179, %v170, 0
    %v233 = vsel %vm179, %v228, 0
    %235 = vmatprep.subr.bf16.mxu0 0
    %236 = vmatpush1.bf16.xpose.msra.mxu0 0
    %237 = vmatprep.subr.bf16.mxu0 0
    %238 = vmatpush1.bf16.xpose.msra.mxu0 0
    %239 = vmatprep.subr.bf16.mxu0 0
    %240 = vmatpush1.bf16.xpose.msra.mxu0 0
    %241 = vmatprep.subr.bf16.mxu0 0
    %242 = vmatpush1.bf16.xpose.msra.mxu0 0
    %243 = vmatprep.subr.bf16.mxu0 0
    %244 = vmatpush1.bf16.xpose.msra.mxu0 0
    %245 = vmatprep.subr.bf16.mxu0 0
    %246 = vmatpush1.bf16.xpose.msra.mxu0 0
    %247 = vmatprep.subr.bf16.mxu0 0
    %248 = vmatpush1.bf16.xpose.msra.mxu0 0
    %249 = vmatprep.subr.bf16.mxu0 0
    %250 = vmatpush1.bf16.xpose.msra.mxu0 %v233
    %251 = vmatprep.subr.bf16.mxu0 0
    %252 = vmatpush2.bf16.xpose.msra.mxu0 0
    %253 = vmatprep.subr.bf16.mxu0 0
    %254 = vmatpush2.bf16.xpose.msra.mxu0 0
    %255 = vmatprep.subr.bf16.mxu0 0
    %256 = vmatpush2.bf16.xpose.msra.mxu0 0
    %257 = vmatprep.subr.bf16.mxu0 0
    %258 = vmatpush2.bf16.xpose.msra.mxu0 0
    %259 = vmatprep.subr.bf16.mxu0 0
    %260 = vmatpush2.bf16.xpose.msra.mxu0 0
    %261 = vmatprep.subr.bf16.mxu0 0
    %262 = vmatpush2.bf16.xpose.msra.mxu0 0
    %263 = vmatprep.subr.bf16.mxu0 0
    %264 = vmatpush2.bf16.xpose.msra.mxu0 0
    %265 = vmatprep.subr.bf16.mxu0 0
    %266 = vmatpush2.bf16.xpose.msra.mxu0 0
    %267 = vmatprep.mubr.bf16.mxu0 0
    %268 = vmatmul.mubr.bf16.gmra.mxu0 %v230
    %v269 = vpop.f32.mrf.mxu0
    %v270 = vadd.f32 0.0, %v269
    %v271 = vpop.f32.mrf.mxu0
    %v272 = vpop.f32.mrf.mxu0
    %v273 = vpop.f32.mrf.mxu0
    %274 = vdwg.mxu0
    %276 = vrot.lane.b32.xlu0 %v172, 64
    %v277 = vpop.permute.xlu0 %276
    %v279 = vsel %vm179, %v172, 0
    %v282 = vsel %vm179, %v277, 0
    %284 = vmatprep.subr.bf16.mxu0 0
    %285 = vmatpush1.bf16.xpose.msra.mxu0 0
    %286 = vmatprep.subr.bf16.mxu0 0
    %287 = vmatpush1.bf16.xpose.msra.mxu0 0
    %288 = vmatprep.subr.bf16.mxu0 0
    %289 = vmatpush1.bf16.xpose.msra.mxu0 0
    %290 = vmatprep.subr.bf16.mxu0 0
    %291 = vmatpush1.bf16.xpose.msra.mxu0 0
    %292 = vmatprep.subr.bf16.mxu0 0
    %293 = vmatpush1.bf16.xpose.msra.mxu0 0
    %294 = vmatprep.subr.bf16.mxu0 0
    %295 = vmatpush1.bf16.xpose.msra.mxu0 0
    %296 = vmatprep.subr.bf16.mxu0 0
    %297 = vmatpush1.bf16.xpose.msra.mxu0 0
    %298 = vmatprep.subr.bf16.mxu0 0
    %299 = vmatpush1.bf16.xpose.msra.mxu0 %v282
    %300 = vmatprep.subr.bf16.mxu0 0
    %301 = vmatpush2.bf16.xpose.msra.mxu0 0
    %302 = vmatprep.subr.bf16.mxu0 0
    %303 = vmatpush2.bf16.xpose.msra.mxu0 0
    %304 = vmatprep.subr.bf16.mxu0 0
    %305 = vmatpush2.bf16.xpose.msra.mxu0 0
    %306 = vmatprep.subr.bf16.mxu0 0
    %307 = vmatpush2.bf16.xpose.msra.mxu0 0
    %308 = vmatprep.subr.bf16.mxu0 0
    %309 = vmatpush2.bf16.xpose.msra.mxu0 0
    %310 = vmatprep.subr.bf16.mxu0 0
    %311 = vmatpush2.bf16.xpose.msra.mxu0 0
    %312 = vmatprep.subr.bf16.mxu0 0
    %313 = vmatpush2.bf16.xpose.msra.mxu0 0
    %314 = vmatprep.subr.bf16.mxu0 0
    %315 = vmatpush2.bf16.xpose.msra.mxu0 0
    %316 = vmatprep.mubr.bf16.mxu0 0
    %317 = vmatmul.mubr.bf16.gmra.mxu0 %v279
    %v318 = vpop.f32.mrf.mxu0
    %v319 = vadd.f32 0.0, %v318
    %v320 = vpop.f32.mrf.mxu0
    %v321 = vpop.f32.mrf.mxu0
    %v322 = vpop.f32.mrf.mxu0
    %323 = vdwg.mxu0
    %325 = vrot.lane.b32.xlu0 %v174, 64
    %v326 = vpop.permute.xlu0 %325
    %v328 = vsel %vm179, %v174, 0
    %v331 = vsel %vm179, %v326, 0
    %333 = vmatprep.subr.bf16.mxu0 0
    %334 = vmatpush1.bf16.xpose.msra.mxu0 0
    %335 = vmatprep.subr.bf16.mxu0 0
    %336 = vmatpush1.bf16.xpose.msra.mxu0 0
    %337 = vmatprep.subr.bf16.mxu0 0
    %338 = vmatpush1.bf16.xpose.msra.mxu0 0
    %339 = vmatprep.subr.bf16.mxu0 0
    %340 = vmatpush1.bf16.xpose.msra.mxu0 0
    %341 = vmatprep.subr.bf16.mxu0 0
    %342 = vmatpush1.bf16.xpose.msra.mxu0 0
    %343 = vmatprep.subr.bf16.mxu0 0
    %344 = vmatpush1.bf16.xpose.msra.mxu0 0
    %345 = vmatprep.subr.bf16.mxu0 0
    %346 = vmatpush1.bf16.xpose.msra.mxu0 0
    %347 = vmatprep.subr.bf16.mxu0 0
    %348 = vmatpush1.bf16.xpose.msra.mxu0 %v331
    %349 = vmatprep.subr.bf16.mxu0 0
    %350 = vmatpush2.bf16.xpose.msra.mxu0 0
    %351 = vmatprep.subr.bf16.mxu0 0
    %352 = vmatpush2.bf16.xpose.msra.mxu0 0
    %353 = vmatprep.subr.bf16.mxu0 0
    %354 = vmatpush2.bf16.xpose.msra.mxu0 0
    %355 = vmatprep.subr.bf16.mxu0 0
    %356 = vmatpush2.bf16.xpose.msra.mxu0 0
    %357 = vmatprep.subr.bf16.mxu0 0
    %358 = vmatpush2.bf16.xpose.msra.mxu0 0
    %359 = vmatprep.subr.bf16.mxu0 0
    %360 = vmatpush2.bf16.xpose.msra.mxu0 0
    %361 = vmatprep.subr.bf16.mxu0 0
    %362 = vmatpush2.bf16.xpose.msra.mxu0 0
    %363 = vmatprep.subr.bf16.mxu0 0
    %364 = vmatpush2.bf16.xpose.msra.mxu0 0
    %365 = vmatprep.mubr.bf16.mxu0 0
    %366 = vmatmul.mubr.bf16.gmra.mxu0 %v328
    %v367 = vpop.f32.mrf.mxu0
    %v368 = vadd.f32 0.0, %v367
    %v369 = vpop.f32.mrf.mxu0
    %v370 = vpop.f32.mrf.mxu0
    %v371 = vpop.f32.mrf.mxu0
    %372 = vdwg.mxu0
    %v373 = vlaneseq
    %v374 = vshrl.u32 %v373, 7
    %v375 = vlaneseq
    %v376 = vand.u32 %v375, 127
    %vm377 = vcmp.le.s32.totalorder %v376, %v374
    %v378 = vsel %vm377, 1, 0
    %vm379 = vcmp.eq.s32.totalorder %v378, 1
    %v380 = vsel %vm379, %v221, -1e+30
    %v381 = vsel %vm379, %v270, -1e+30
    %v382 = vsel %vm379, %v319, -1e+30
    %v383 = vsel %vm379, %v368, -1e+30
    %vm384 = vcmask 64512
    %v385 = vsel %vm384, %v380, -inf
    %386 = vmax.xlane.f32.xlu0 %v385
    %v387 = vpop.xlane.xlu0 %386
    %v388 = vsel %vm384, %v381, -inf
    %389 = vmax.xlane.f32.xlu0 %v388
    %v390 = vpop.xlane.xlu0 %389
    %v391 = vsel %vm384, %v382, -inf
    %392 = vmax.xlane.f32.xlu0 %v391
    %v393 = vpop.xlane.xlu0 %392
    %v394 = vsel %vm384, %v383, -inf
    %395 = vmax.xlane.f32.xlu0 %v394
    %v396 = vpop.xlane.xlu0 %395
    %v397 = vsub.f32 %v380, %v387
    %v398 = vsub.f32 %v381, %v390
    %v399 = vsub.f32 %v382, %v393
    %v400 = vsub.f32 %v383, %v396
    %v401 = vmul.f32 %v397, 1.442695
    %v402 = vpow.pop %v401
    %v403 = vmul.f32 %v398, 1.442695
    %v404 = vpow.pop %v403
    %v405 = vmul.f32 %v399, 1.442695
    %v406 = vpow.pop %v405
    %v407 = vmul.f32 %v400, 1.442695
    %v408 = vpow.pop %v407
    %v409 = vsel %vm384, %v402, 0.0
    %410 = vadd.xlane.f32.xlu0 %v409
    %v411 = vpop.xlane.xlu0 %410
    %v412 = vsel %vm384, %v404, 0.0
    %413 = vadd.xlane.f32.xlu0 %v412
    %v414 = vpop.xlane.xlu0 %413
    %v415 = vsel %vm384, %v406, 0.0
    %416 = vadd.xlane.f32.xlu0 %v415
    %v417 = vpop.xlane.xlu0 %416
    %v418 = vsel %vm384, %v408, 0.0
    %419 = vadd.xlane.f32.xlu0 %v418
    %v420 = vpop.xlane.xlu0 %419
    %v421 = vrcp.pop %v411
    %v422 = vrcp.pop %v414
    %v423 = vrcp.pop %v417
    %v424 = vrcp.pop %v420
    %v425 = vmul.f32 %v402, %v421
    %v426 = vmul.f32 %v404, %v422
    %v427 = vmul.f32 %v406, %v423
    %v428 = vmul.f32 %v408, %v424
    %v429 = vpack.c.bf16 %v425, %v425
    %v430 = vpack.c.bf16 %v426, %v426
    %v431 = vpack.c.bf16 %v427, %v427
    %v432 = vpack.c.bf16 %v428, %v428
    %v434 = vsel %vm384, %v429, 0
    %vm436 = vcmask 1043456
    %v438 = vsel %vm436, %v169, 0
    %440 = vmatprep.subr.bf16.mxu0 0
    %441 = vmatpush1.bf16.msra.mxu0 0
    %442 = vmatprep.subr.bf16.mxu0 0
    %443 = vmatpush1.bf16.msra.mxu0 0
    %444 = vmatprep.subr.bf16.mxu0 0
    %445 = vmatpush1.bf16.msra.mxu0 0
    %446 = vmatprep.subr.bf16.mxu0 0
    %447 = vmatpush1.bf16.msra.mxu0 0
    %448 = vmatprep.subr.bf16.mxu0 0
    %449 = vmatpush1.bf16.msra.mxu0 0
    %450 = vmatprep.subr.bf16.mxu0 0
    %451 = vmatpush1.bf16.msra.mxu0 0
    %452 = vmatprep.subr.bf16.mxu0 0
    %453 = vmatpush1.bf16.msra.mxu0 0
    %454 = vmatprep.subr.bf16.mxu0 0
    %455 = vmatpush1.bf16.msra.mxu0 %v438
    %456 = vmatprep.subr.bf16.mxu0 0
    %457 = vmatpush2.bf16.msra.mxu0 0
    %458 = vmatprep.subr.bf16.mxu0 0
    %459 = vmatpush2.bf16.msra.mxu0 0
    %460 = vmatprep.subr.bf16.mxu0 0
    %461 = vmatpush2.bf16.msra.mxu0 0
    %462 = vmatprep.subr.bf16.mxu0 0
    %463 = vmatpush2.bf16.msra.mxu0 0
    %464 = vmatprep.subr.bf16.mxu0 0
    %465 = vmatpush2.bf16.msra.mxu0 0
    %466 = vmatprep.subr.bf16.mxu0 0
    %467 = vmatpush2.bf16.msra.mxu0 0
    %468 = vmatprep.subr.bf16.mxu0 0
    %469 = vmatpush2.bf16.msra.mxu0 0
    %470 = vmatprep.subr.bf16.mxu0 0
    %471 = vmatpush2.bf16.msra.mxu0 0
    %472 = vmatprep.mubr.bf16.mxu0 0
    %473 = vmatmul.mubr.bf16.gmra.mxu0 %v434
    %v474 = vpop.f32.mrf.mxu0
    %v475 = vadd.f32 0.0, %v474
    %v476 = vpop.f32.mrf.mxu0
    %v477 = vpop.f32.mrf.mxu0
    %v478 = vpop.f32.mrf.mxu0
    %479 = vdwg.mxu0
    %v481 = vsel %vm384, %v430, 0
    %v484 = vsel %vm436, %v171, 0
    %486 = vmatprep.subr.bf16.mxu0 0
    %487 = vmatpush1.bf16.msra.mxu0 0
    %488 = vmatprep.subr.bf16.mxu0 0
    %489 = vmatpush1.bf16.msra.mxu0 0
    %490 = vmatprep.subr.bf16.mxu0 0
    %491 = vmatpush1.bf16.msra.mxu0 0
    %492 = vmatprep.subr.bf16.mxu0 0
    %493 = vmatpush1.bf16.msra.mxu0 0
    %494 = vmatprep.subr.bf16.mxu0 0
    %495 = vmatpush1.bf16.msra.mxu0 0
    %496 = vmatprep.subr.bf16.mxu0 0
    %497 = vmatpush1.bf16.msra.mxu0 0
    %498 = vmatprep.subr.bf16.mxu0 0
    %499 = vmatpush1.bf16.msra.mxu0 0
    %500 = vmatprep.subr.bf16.mxu0 0
    %501 = vmatpush1.bf16.msra.mxu0 %v484
    %502 = vmatprep.subr.bf16.mxu0 0
    %503 = vmatpush2.bf16.msra.mxu0 0
    %504 = vmatprep.subr.bf16.mxu0 0
    %505 = vmatpush2.bf16.msra.mxu0 0
    %506 = vmatprep.subr.bf16.mxu0 0
    %507 = vmatpush2.bf16.msra.mxu0 0
    %508 = vmatprep.subr.bf16.mxu0 0
    %509 = vmatpush2.bf16.msra.mxu0 0
    %510 = vmatprep.subr.bf16.mxu0 0
    %511 = vmatpush2.bf16.msra.mxu0 0
    %512 = vmatprep.subr.bf16.mxu0 0
    %513 = vmatpush2.bf16.msra.mxu0 0
    %514 = vmatprep.subr.bf16.mxu0 0
    %515 = vmatpush2.bf16.msra.mxu0 0
    %516 = vmatprep.subr.bf16.mxu0 0
    %517 = vmatpush2.bf16.msra.mxu0 0
    %518 = vmatprep.mubr.bf16.mxu0 0
    %519 = vmatmul.mubr.bf16.gmra.mxu0 %v481
    %v520 = vpop.f32.mrf.mxu0
    %v521 = vadd.f32 0.0, %v520
    %v522 = vpop.f32.mrf.mxu0
    %v523 = vpop.f32.mrf.mxu0
    %v524 = vpop.f32.mrf.mxu0
    %525 = vdwg.mxu0
    %v527 = vsel %vm384, %v431, 0
    %v530 = vsel %vm436, %v173, 0
    %532 = vmatprep.subr.bf16.mxu0 0
    %533 = vmatpush1.bf16.msra.mxu0 0
    %534 = vmatprep.subr.bf16.mxu0 0
    %535 = vmatpush1.bf16.msra.mxu0 0
    %536 = vmatprep.subr.bf16.mxu0 0
    %537 = vmatpush1.bf16.msra.mxu0 0
    %538 = vmatprep.subr.bf16.mxu0 0
    %539 = vmatpush1.bf16.msra.mxu0 0
    %540 = vmatprep.subr.bf16.mxu0 0
    %541 = vmatpush1.bf16.msra.mxu0 0
    %542 = vmatprep.subr.bf16.mxu0 0
    %543 = vmatpush1.bf16.msra.mxu0 0
    %544 = vmatprep.subr.bf16.mxu0 0
    %545 = vmatpush1.bf16.msra.mxu0 0
    %546 = vmatprep.subr.bf16.mxu0 0
    %547 = vmatpush1.bf16.msra.mxu0 %v530
    %548 = vmatprep.subr.bf16.mxu0 0
    %549 = vmatpush2.bf16.msra.mxu0 0
    %550 = vmatprep.subr.bf16.mxu0 0
    %551 = vmatpush2.bf16.msra.mxu0 0
    %552 = vmatprep.subr.bf16.mxu0 0
    %553 = vmatpush2.bf16.msra.mxu0 0
    %554 = vmatprep.subr.bf16.mxu0 0
    %555 = vmatpush2.bf16.msra.mxu0 0
    %556 = vmatprep.subr.bf16.mxu0 0
    %557 = vmatpush2.bf16.msra.mxu0 0
    %558 = vmatprep.subr.bf16.mxu0 0
    %559 = vmatpush2.bf16.msra.mxu0 0
    %560 = vmatprep.subr.bf16.mxu0 0
    %561 = vmatpush2.bf16.msra.mxu0 0
    %562 = vmatprep.subr.bf16.mxu0 0
    %563 = vmatpush2.bf16.msra.mxu0 0
    %564 = vmatprep.mubr.bf16.mxu0 0
    %565 = vmatmul.mubr.bf16.gmra.mxu0 %v527
    %v566 = vpop.f32.mrf.mxu0
    %v567 = vadd.f32 0.0, %v566
    %v568 = vpop.f32.mrf.mxu0
    %v569 = vpop.f32.mrf.mxu0
    %v570 = vpop.f32.mrf.mxu0
    %571 = vdwg.mxu0
    %v573 = vsel %vm384, %v432, 0
    %v576 = vsel %vm436, %v175, 0
    %578 = vmatprep.subr.bf16.mxu0 0
    %579 = vmatpush1.bf16.msra.mxu0 0
    %580 = vmatprep.subr.bf16.mxu0 0
    %581 = vmatpush1.bf16.msra.mxu0 0
    %582 = vmatprep.subr.bf16.mxu0 0
    %583 = vmatpush1.bf16.msra.mxu0 0
    %584 = vmatprep.subr.bf16.mxu0 0
    %585 = vmatpush1.bf16.msra.mxu0 0
    %586 = vmatprep.subr.bf16.mxu0 0
    %587 = vmatpush1.bf16.msra.mxu0 0
    %588 = vmatprep.subr.bf16.mxu0 0
    %589 = vmatpush1.bf16.msra.mxu0 0
    %590 = vmatprep.subr.bf16.mxu0 0
    %591 = vmatpush1.bf16.msra.mxu0 0
    %592 = vmatprep.subr.bf16.mxu0 0
    %593 = vmatpush1.bf16.msra.mxu0 %v576
    %594 = vmatprep.subr.bf16.mxu0 0
    %595 = vmatpush2.bf16.msra.mxu0 0
    %596 = vmatprep.subr.bf16.mxu0 0
    %597 = vmatpush2.bf16.msra.mxu0 0
    %598 = vmatprep.subr.bf16.mxu0 0
    %599 = vmatpush2.bf16.msra.mxu0 0
    %600 = vmatprep.subr.bf16.mxu0 0
    %601 = vmatpush2.bf16.msra.mxu0 0
    %602 = vmatprep.subr.bf16.mxu0 0
    %603 = vmatpush2.bf16.msra.mxu0 0
    %604 = vmatprep.subr.bf16.mxu0 0
    %605 = vmatpush2.bf16.msra.mxu0 0
    %606 = vmatprep.subr.bf16.mxu0 0
    %607 = vmatpush2.bf16.msra.mxu0 0
    %608 = vmatprep.subr.bf16.mxu0 0
    %609 = vmatpush2.bf16.msra.mxu0 0
    %610 = vmatprep.mubr.bf16.mxu0 0
    %611 = vmatmul.mubr.bf16.gmra.mxu0 %v573
    %v612 = vpop.f32.mrf.mxu0
    %v613 = vadd.f32 0.0, %v612
    %v614 = vpop.f32.mrf.mxu0
    %v615 = vpop.f32.mrf.mxu0
    %v616 = vpop.f32.mrf.mxu0
    %617 = vdwg.mxu0
    %620 = vrot.lane.b32.xlu0 %v521, 64
    %v621 = vpop.permute.xlu0 %620
    %622 = vrot.lane.b32.xlu0 %v613, 64
    %v623 = vpop.permute.xlu0 %622
    %v626 = vsel %vm179, %v475, %v621
    %v627 = vsel %vm179, %v567, %v623
    %628 = vst [vmem:[#allocation2] sm:$0xff] %v626
    %629 = vst [vmem:[#allocation2 + $0x8] sm:$0xff] %v627
    // Predicated region
    $region10: #{tpu_custom_call.1} parent=1 // pred_check
      _
    $region11: #{tpu_custom_call.1} parent=1 // pred_check_branch
      %631 = sbr.rel (0) target = $region13
    $region12: #{tpu_custom_call.1} parent=1 // pred_region
      %s633 = ssub.s32 256, 256
      %634 = vsyncadd [#allocation3], %s633
      %s635 = sshll.u32 [#allocation2], 4
      %s636 = int_to_ptr.vmem [resolvable:$true] %s635
      %641 = dma.vmem_to_hbm [thread:$0]  %s636, 256, %s2, [#allocation3], 128, 128, 8
    $region13: #{tpu_custom_call.1} parent=1 // pred_fallthru
      _
    // Predicated region
    $region14: #{tpu_custom_call.1} parent=1 // pred_check
      _
    $region15: #{tpu_custom_call.1} parent=1 // pred_check_branch
      %643 = sbr.rel (0) target = $region17
    $region16: #{tpu_custom_call.1} parent=1 // pred_region
      %644 = dma.done [#allocation3], 256
    $region17: #{tpu_custom_call.1} parent=1 // pred_fallthru
      _
    %645 = vsyncpa [#allocation3], 1

</llo_original>
